<compile_context>
chip_gen: v7x
topology: tpu7x:2x2x1
jax: 0.10.0
libtpu: 0.0.40
codegen_flags: <defaults>
</compile_context>

<pallas_src>
import functools

import numpy as np
import jax
import jax.numpy as jnp
from jax import lax
from jax.experimental import pallas as pl
from jax.experimental.pallas import tpu as pltpu

# ----------------------------------------------------------------------------
# Neuron / network constants (synthetic stand-ins for netParams['neuron'])
# ----------------------------------------------------------------------------
THETA = 1.0        # firing threshold (vThMant analogue)
ALPHA_I = 0.5      # current decay factor
ALPHA_V = 0.75     # voltage decay factor
FRAME_DROPE = 3    # args.frame_drope
LANES = 128
VMEM_LIMIT = 32 * 1024 * 1024   # safe on v5e/v6e/v7x; tiles here are tiny


def _ru(x, m):
    return ((x + m - 1) // m) * m


# ----------------------------------------------------------------------------
# Pallas kernels
# ----------------------------------------------------------------------------
def _matmul_kernel(a_ref, b_ref, o_ref):
    o_ref[...] = jnp.dot(a_ref[...], b_ref[...],
                         preferred_element_type=jnp.float32)


def pallas_matmul(a, b, *, tm_max=512):
    """(M, K) @ (K, N) -> (M, N) float32.

    bf16 operands / f32 accumulation; large M tiles; N padded to a multiple of
    128 so output stores are lane-dense; padding sliced off on return."""
    M, K = a.shape
    _, N = b.shape
    Np = _ru(N, LANES)
    tm = _ru(M, 8) if M <= tm_max else tm_max
    Mp = _ru(M, tm)
    a = a.astype(jnp.bfloat16)
    b = b.astype(jnp.bfloat16)
    if Mp != M:
        a = jnp.pad(a, ((0, Mp - M), (0, 0)))
    if Np != N:
        b = jnp.pad(b, ((0, 0), (0, Np - N)))
    out = pl.pallas_call(
        _matmul_kernel,
        grid=(Mp // tm,),
        in_specs=[pl.BlockSpec((tm, K), lambda i: (i, 0)),
                  pl.BlockSpec((K, Np), lambda i: (0, 0))],
        out_specs=pl.BlockSpec((tm, Np), lambda i: (i, 0)),
        out_shape=jax.ShapeDtypeStruct((Mp, Np), jnp.float32),
        compiler_params=pltpu.CompilerParams(
            dimension_semantics=("parallel",),
            vmem_limit_bytes=VMEM_LIMIT),
    )(a, b)
    return out[:M, :N]


def _conv_accum_kernel(x_ref, w_ref, o_ref, acc_ref):
    # grid = (row_tiles, k_height_taps); the height-tap axis is a reduction.
    @pl.when(pl.program_id(1) == 0)
    def _init():
        acc_ref[...] = jnp.zeros_like(acc_ref)

    acc_ref[...] += jnp.dot(x_ref[0], w_ref[0],
                            preferred_element_type=jnp.float32)

    @pl.when(pl.program_id(1) == pl.num_programs(1) - 1)
    def _fin():
        o_ref[...] = acc_ref[...]


def conv2d_same(x, band, k, cout, *, tm_max=512):
    """'same' conv, stride 1, no kxk im2col HBM blow-up.

    x: (T, B, H, W, Cin).  band: (k, Wp*Cin, W*Cout) banded weight with the
    width taps + input channels folded into the contraction dim.  Only k
    height-tap shifted views of the (flattened, padded) input are read and
    accumulated over a reduction grid axis inside one Pallas kernel."""
    T, B, H, W, Cin = x.shape
    p = (k - 1) // 2
    Hq, Wp = H + 2 * p, W + 2 * p
    Nc = W * cout
    xq = jnp.pad(x.astype(jnp.bfloat16), ((0, 0), (0, 0), (p, p), (p, p), (0, 0)))
    R = T * B * Hq
    x2 = xq.reshape(R, Wp * Cin)
    x2 = jnp.pad(x2, ((0, k - 1), (0, 0)))
    # k height-tap shifted views (k-fold read instead of a k*k im2col copy)
    x3 = jnp.stack([x2[d:d + R] for d in range(k)], axis=0)
    tm = _ru(R, 8) if R <= tm_max else tm_max
    Rp = _ru(R, tm)
    if Rp != R:
        x3 = jnp.pad(x3, ((0, 0), (0, Rp - R), (0, 0)))
    out = pl.pallas_call(
        _conv_accum_kernel,
        grid=(Rp // tm, k),
        in_specs=[pl.BlockSpec((1, tm, Wp * Cin), lambda i, d: (d, i, 0)),
                  pl.BlockSpec((1, Wp * Cin, Nc), lambda i, d: (d, 0, 0))],
        out_specs=pl.BlockSpec((tm, Nc), lambda i, d: (i, 0)),
        out_shape=jax.ShapeDtypeStruct((Rp, Nc), jnp.float32),
        scratch_shapes=[pltpu.VMEM((tm, Nc), jnp.float32)],
        compiler_params=pltpu.CompilerParams(
            dimension_semantics=("parallel", "arbitrary"),
            vmem_limit_bytes=VMEM_LIMIT),
    )(x3, band)
    # rows h >= H of each (t, b) group are junk (spill into the next group)
    return out[:R].reshape(T, B, Hq, W, cout)[:, :, :H]


def _loihi_kernel(x_ref, o_ref, d_ref, u_ref, v_ref, *,
                  alpha_i, alpha_v, theta, unroll):
    # CUBA Loihi-style neuron: current/voltage decay, threshold, reset.
    # delayShift(spike, 1) fused: spike of step t is written to row t+1,
    # row 0 is zero.  Per-row spike counts (frame density) fused as well.
    # TODO(synk): exact Loihi 2^12-scaled fixed-point decay/quantization of
    # slayer.spikeLoihi is approximated with float32 dynamics.
    T = x_ref.shape[0]
    u_ref[...] = jnp.zeros_like(u_ref)
    v_ref[...] = jnp.zeros_like(v_ref)
    o_ref[0] = jnp.zeros(o_ref.shape[1:], o_ref.dtype)
    d_ref[0] = jnp.zeros(d_ref.shape[1:], d_ref.dtype)

    def body(t, carry):
        u = alpha_i * u_ref[...] + x_ref[t].astype(jnp.float32)
        v = alpha_v * v_ref[...] + u
        s = (v >= theta).astype(jnp.float32)
        u_ref[...] = u
        v_ref[...] = v * (1.0 - s)                         # reset on spike
        o_ref[t + 1] = s.astype(o_ref.dtype)               # fused delayShift
        d_ref[t + 1] = jnp.sum(s, axis=1, keepdims=True)   # fused density
        return carry

    lax.fori_loop(0, T - 1, body, 0, unroll=unroll)


def spike_loihi(x):
    """Loihi dynamics + fused delayShift(1) + fused per-frame spike count.

    x: (T, B, M) -> (spikes (T, B, M) bf16 (exact 0/1), density (B, T) f32)."""
    T, B, M = x.shape
    Mp = _ru(M, LANES)
    if Mp != M:
        x = jnp.pad(x, ((0, 0), (0, 0), (0, Mp - M)))
    rpb = Mp // LANES
    R = B * rpb
    xr = x.reshape(T, R, LANES)
    # tile rows so the block's second-last dim is 8-aligned (or the full dim)
    Rp = R if R <= 8 else _ru(R, 8)
    tr = Rp if Rp <= 8 else 8
    if Rp != R:
        xr = jnp.pad(xr, ((0, 0), (0, Rp - R), (0, 0)))
    spikes, dens = pl.pallas_call(
        functools.partial(_loihi_kernel, alpha_i=ALPHA_I, alpha_v=ALPHA_V,
                          theta=THETA, unroll=(T <= 64)),
        grid=(Rp // tr,),
        in_specs=[pl.BlockSpec((T, tr, LANES), lambda i: (0, i, 0))],
        out_specs=[pl.BlockSpec((T, tr, LANES), lambda i: (0, i, 0)),
                   pl.BlockSpec((T, tr, 1), lambda i: (0, i, 0))],
        out_shape=[jax.ShapeDtypeStruct((T, Rp, LANES), jnp.bfloat16),
                   jax.ShapeDtypeStruct((T, Rp, 1), jnp.float32)],
        scratch_shapes=[pltpu.VMEM((tr, LANES), jnp.float32),
                        pltpu.VMEM((tr, LANES), jnp.float32)],
        compiler_params=pltpu.CompilerParams(
            dimension_semantics=("parallel",),
            vmem_limit_bytes=VMEM_LIMIT),
    )(xr)
    spikes = spikes[:, :R].reshape(T, B, Mp)[:, :, :M]
    density = jnp.transpose(
        jnp.sum(dens[:, :R, 0].reshape(T, B, rpb), axis=2), (1, 0))
    return spikes, density


# ----------------------------------------------------------------------------
# Layer wrappers / glue
# ----------------------------------------------------------------------------
def sum_pool(x, k, pmat):
    """SLAYER pool(k): k x k window sum * fixed weight, as a lane-dense matmul.
    x: (T, B, H, W, C) -> (T, B, H//k, W//k, C) float32."""
    T, B, H, W, C = x.shape
    Ho, Wo = H // k, W // k
    xr = x.reshape(T * B * Ho, k * W * C)              # free reshape
    out = pallas_matmul(xr, pmat)                      # (T*B*Ho, Wo*C)
    return out.reshape(T, B, Ho, Wo, C)


def dense(x, w_t):
    """x: (T, B, F); w_t: pre-transposed weight (F, out) in bf16."""
    T, B, F = x.shape
    out = pallas_matmul(x.reshape(T * B, F), w_t)
    return out.reshape(T, B, w_t.shape[1])


def frame_removal(density, thr, counter_init):
    """Sequential frame-drop logic (counter carried across batches, as in the
    original nested Python loops).  density: (B, T)."""
    B, T = density.shape
    low = (density < thr).reshape(-1)                  # batch-major order

    def step(c, l):
        c = jnp.where(l, c + 1, jnp.int32(0))
        trig = (c == FRAME_DROPE)
        c = jnp.where(trig, jnp.int32(0), c)
        return c, trig

    counter_out, trig = lax.scan(step, jnp.asarray(counter_init, jnp.int32), low)
    trig = trig.reshape(B, T)
    # trigger at (b, t) zeroes frames (b, (t-j) mod T) for j = 0..FRAME_DROPE-1
    # (mod T reproduces PyTorch negative-index wraparound of the original code)
    hit = jnp.zeros((B, T), jnp.float32)
    for j in range(FRAME_DROPE):
        hit = hit + jnp.roll(trig.astype(jnp.float32), -j, axis=1)
    mask = (hit == 0.0).astype(jnp.float32)
    dropped = FRAME_DROPE * jnp.sum(trig.astype(jnp.int32))
    return mask, counter_out, dropped


def apply_mask(x, mask):
    """x: (T, B, ...); mask: (B, T) of 0/1."""
    m = jnp.transpose(mask).astype(x.dtype)
    return x * m.reshape(m.shape + (1,) * (x.ndim - 2))


# ----------------------------------------------------------------------------
# Parameter preprocessing (banded conv weights, pool matrices)
# ----------------------------------------------------------------------------
def _pool_matrix(k, W, C):
    """(k*W*C, Wo*C) matrix implementing the per-channel k x k sum-pool."""
    Wo = W // k
    scale = 1.1 * THETA / float(k * k)
    P = np.zeros((k * W * C, Wo * C), np.float32)
    for ki in range(k):
        for wo in range(Wo):
            for kj in range(k):
                for c in range(C):
                    P[ki * W * C + (wo * k + kj) * C + c, wo * C + c] = scale
    return jnp.asarray(P, jnp.bfloat16)


def _conv_band(w_pt, W, k):
    """Banded weight (k, Wp*Cin, W*Cout) from PyTorch weight (Cout, Cin, k, k):
    folds the width taps + input channels into the matmul contraction dim."""
    w_np = np.asarray(jax.device_get(w_pt), np.float32)
    Cout, Cin = w_np.shape[0], w_np.shape[1]
    p = (k - 1) // 2
    Wp = W + 2 * p
    band = np.zeros((k, Wp, Cin, W, Cout), np.float32)
    for d in range(k):
        for dj in range(k):
            blk = w_np[:, :, d, dj].T                  # (Cin, Cout)
            for w in range(W):
                band[d, w + dj, :, w, :] = blk
    return jnp.asarray(band.reshape(k, Wp * Cin, W * Cout), jnp.bfloat16)


def init_params(key, in_hw=(32, 32), in_ch=2):
    H0, W0 = in_hw
    H1, W1 = H0 // 4, W0 // 4          # after pool1 (conv1 / pool2 spatial)
    H2, W2 = H1 // 2, W1 // 2          # after pool2 (conv2 / pool3 spatial)
    H3, W3 = H2 // 2, W2 // 2          # after pool3
    flat = 32 * H3 * W3
    k1, k2, k3, k4 = jax.random.split(key, 4)
    conv1 = jax.random.normal(k1, (16, in_ch, 5, 5), jnp.float32) * 0.05 * 10.0
    conv2 = jax.random.normal(k2, (32, 16, 3, 3), jnp.float32) * 0.05 * 50.0
    fc1 = jax.random.normal(k3, (512, flat), jnp.float32) * 0.02 * 100.0
    fc2 = jax.random.normal(k4, (11, 512), jnp.float32) * 0.02 * 100.0
    return {
        "conv1_band": _conv_band(conv1, W1, 5),
        "conv2_band": _conv_band(conv2, W2, 3),
        "pool1": _pool_matrix(4, W0, in_ch),
        "pool2": _pool_matrix(2, W1, 16),
        "pool3": _pool_matrix(2, W2, 32),
        # pre-transposed, MXU-dtype dense weights (no per-call transpose/cast)
        "fc1_t": jnp.transpose(fc1).astype(jnp.bfloat16),
        "fc2_t": jnp.transpose(fc2).astype(jnp.bfloat16),
    }


# ----------------------------------------------------------------------------
# Full forward pass
# ----------------------------------------------------------------------------
def network_forward(spike_input, threshold, params):
    """spike_input: (B, 2, H, W, T)  ->  (B, 11, 1, 1, T)."""
    B, C, H, W, T = spike_input.shape
    # single relayout to the time-major channels-last pipeline layout
    x = jnp.transpose(spike_input, (4, 0, 2, 3, 1)).astype(jnp.bfloat16)

    # --- pool1(4) -> spikeLoihi (+delayShift, +density fused) ---
    x = sum_pool(x, 4, params["pool1"])
    x, dens = spike_loihi(x.reshape(T, B, -1))
    x = x.reshape(T, B, H // 4, W // 4, C)
    mask, counter, dropped = frame_removal(dens, jnp.float32(threshold[0]), 0)
    x = apply_mask(x, mask)

    # --- conv1 (2->16, 5x5, pad 2) -> spikeLoihi ---
    x = conv2d_same(x, params["conv1_band"], 5, 16)
    x, _ = spike_loihi(x.reshape(T, B, -1))
    x = x.reshape(T, B, H // 4, W // 4, 16)

    # --- pool2(2) -> spikeLoihi ; frame removal #2 (counter carried) ---
    x = sum_pool(x, 2, params["pool2"])
    x, dens = spike_loihi(x.reshape(T, B, -1))
    x = x.reshape(T, B, H // 8, W // 8, 16)
    mask, counter, d2 = frame_removal(dens, jnp.float32(threshold[1]), counter)
    dropped = dropped + d2
    x = apply_mask(x, mask)

    # --- conv2 (16->32, 3x3, pad 1) -> spikeLoihi ---
    x = conv2d_same(x, params["conv2_band"], 3, 32)
    x, _ = spike_loihi(x.reshape(T, B, -1))
    x = x.reshape(T, B, H // 8, W // 8, 32)

    # --- pool3(2) -> flatten (C,H,W order, as in the reference reshape) ->
    #     spikeLoihi ; frame removal #3 (counter reset) ---
    x = sum_pool(x, 2, params["pool3"])
    H3, W3 = H // 16, W // 16
    x = jnp.transpose(x, (0, 1, 4, 2, 3)).reshape(T, B, 32 * H3 * W3)
    x, dens = spike_loihi(x)
    mask, counter, d3 = frame_removal(dens, jnp.float32(threshold[2]), 0)
    dropped = dropped + d3
    x = apply_mask(x, mask)

    # --- fc1 -> spikeLoihi ---
    x = dense(x, params["fc1_t"])
    x, _ = spike_loihi(x)

    # --- fc2 -> spikeLoihi ---
    x = dense(x, params["fc2_t"])
    x, _ = spike_loihi(x)

    # back to SLAYER layout (B, numClasses, 1, 1, T)
    return jnp.transpose(x, (1, 2, 0))[:, :, None, None, :].astype(jnp.float32)


# ----------------------------------------------------------------------------
# Deterministic parameters + example run
# ----------------------------------------------------------------------------
if __name__ == "__main__":
    # Small shapes consistent with the module:
    #   input (B, 2, 32, 32, T): pool1(4)->8, conv1->8, pool2(2)->4,
    #   conv2->4, pool3(2)->2 => fc1 in-features = 32*2*2 = 128
    B, C, H, W, T = 2, 2, 32, 32, 8
    key = jax.random.PRNGKey(0)
    kp, kx = jax.random.split(key)
    params = init_params(kp, in_hw=(H, W), in_ch=C)
    spike_input = (jax.random.uniform(kx, (B, C, H, W, T)) < 0.3).astype(jnp.float32)

    threshold = [20.0, 60.0, 10.0]          # threshold[0..2] as in forward()

    out = network_forward(spike_input, threshold, params)
    out = jax.block_until_ready(out)

    assert out.shape == (B, 11, 1, 1, T), out.shape
    assert bool(jnp.all(jnp.isfinite(out)))
    print("KERNEL_OK")
</pallas_src>

<mosaic_0001>
module attributes {stable_mosaic.version = 11 : i64} {
  func.func @_matmul_kernel(%arg0: i32, %arg1: memref<128x256xbf16, #tpu.memory_space<vmem>>, %arg2: memref<256x128xbf16, #tpu.memory_space<vmem>>, %arg3: memref<128x128xf32, #tpu.memory_space<vmem>>) attributes {dimension_semantics = [#tpu.dimension_semantics<parallel>], iteration_bounds = array<i64: 1>, scalar_prefetch = 0 : i64, scratch_operands = 0 : i64, tpu.core_type = #tpu.core_type<tc>, window_params = [{transform_indices = @transform_0, window_bounds = array<i64: 128, 256>}, {pipeline_mode = #tpu.pipeline_mode<synchronous>, transform_indices = @transform_1, window_bounds = array<i64: 256, 128>}, {transform_indices = @transform_2, window_bounds = array<i64: 128, 128>}]} {
    %c0 = arith.constant 0 : index
    %c0_0 = arith.constant 0 : index
    %0 = vector.load %arg1[%c0, %c0_0] : memref<128x256xbf16, #tpu.memory_space<vmem>>, vector<128x256xbf16>
    %c0_1 = arith.constant 0 : index
    %c0_2 = arith.constant 0 : index
    %1 = vector.load %arg2[%c0_1, %c0_2] : memref<256x128xbf16, #tpu.memory_space<vmem>>, vector<256x128xbf16>
    %cst = arith.constant dense<0.000000e+00> : vector<128x128xf32>
    %2 = tpu.matmul %0, %1, %cst {dimension_numbers = #tpu.dot_dimension_numbers<[1], [0], [0], [1], [0, 0, 1, 1], [], []>} : vector<128x256xbf16>, vector<256x128xbf16>, vector<128x128xf32> -> vector<128x128xf32>
    %c0_3 = arith.constant 0 : index
    %c0_4 = arith.constant 0 : index
    %3 = vector.load %arg3[%c0_3, %c0_4] : memref<128x128xf32, #tpu.memory_space<vmem>>, vector<128x128xf32>
    tpu.vector_store %arg3[%c0_3, %c0_4], %2 {strides = array<i32>} : memref<128x128xf32, #tpu.memory_space<vmem>>, vector<128x128xf32>,
    return
  }
  func.func @transform_0(%arg0: i32) -> (i32, i32) {
    %c0_i32 = arith.constant 0 : i32
    %c0_i32_0 = arith.constant 0 : i32
    return %arg0, %c0_i32 : i32, i32
  }
  func.func @transform_1(%arg0: i32) -> (i32, i32) {
    %c0_i32 = arith.constant 0 : i32
    %c0_i32_0 = arith.constant 0 : i32
    %c0_i32_1 = arith.constant 0 : i32
    return %c0_i32, %c0_i32_0 : i32, i32
  }
  func.func @transform_2(%arg0: i32) -> (i32, i32) {
    %c0_i32 = arith.constant 0 : i32
    %c0_i32_0 = arith.constant 0 : i32
    return %arg0, %c0_i32 : i32, i32
  }
}

</mosaic_0001>

<llo_original>
// kernel: tpu_custom_call.1
$region0: #{tpu_custom_call.1}
  #allocation0 [shape = 'u32[]', space=smem, size = 0x4, offset = 0x4, fixed_abs, tag = 'smem constant byte address 0x4 - core index']
  #allocation1 [shape = 'u32[144,128]{1,0:T(1,128)}', space=vmem, size = 0x12000, scoped, tag = 'internal scratch']
  %s0 = inlined_call_operand.hbm [shape: bf16[128,256], index: 0, kind: input, shape index: {}]
  %s1 = inlined_call_operand.hbm [shape: bf16[256,128], index: 1, kind: input, shape index: {}]
  %s2 = inlined_call_operand.hbm [shape: f32[128,128], index: 2, kind: output, shape index: {}]
  %s3 = sld [smem:[#allocation0]]
  $region26: #{tpu_custom_call.1} parent=0
    _
  %s5 = ssub.s32 1, %s3
  %s6 = scalar_select 0, %s5, %s3
  $region1: #{tpu_custom_call.1} parent=0
    #allocation2 [shape = 'u8[65536]{0}', space=vmem, size = 0x10000, scoped, tag = 'input window, operand 0, single buffered']
    #allocation3 [shape = 's32[1]{0}', space=sflag, size = 0x4, scoped, tag = 'scoped memory for tpu_custom_call.1']
    #allocation4 [shape = 's32[1]{0}', space=sflag, size = 0x4, scoped, tag = 'scoped memory for tpu_custom_call.1']
    #allocation5 [shape = 'u8[65536]{0}', space=vmem, size = 0x10000, scoped, tag = 'input window, operand 1, single buffered']
    #allocation6 [shape = 's32[1]{0}', space=sflag, size = 0x4, scoped, tag = 'scoped memory for tpu_custom_call.1']
    #allocation7 [shape = 'u8[65536]{0}', space=vmem, size = 0x10000, scoped, tag = 'output window, operand 0, single buffered']
    %7 = vsyncpa [#allocation3], 0
    %8 = vsyncpa [#allocation6], 0
    %9 = vsyncpa [#allocation4], 0
    // Predicated region
    $region2: #{tpu_custom_call.1} parent=1 // pred_check
      _
    $region3: #{tpu_custom_call.1} parent=1 // pred_check_branch
      %11 = sbr.rel (0) target = $region5
    $region4: #{tpu_custom_call.1} parent=1 // pred_region
      %s13 = ssub.s32 2048, 2048
      %14 = vsyncadd [#allocation3], %s13
      %s15 = sshll.u32 [#allocation2], 4
      %s16 = int_to_ptr.vmem [resolvable:$true] %s15
      %21 = dma.hbm_to_vmem [thread:$0]  %s0, 2048, %s16, [#allocation3], 128, 128, 8
    $region5: #{tpu_custom_call.1} parent=1 // pred_fallthru
      _
    // Predicated region
    $region6: #{tpu_custom_call.1} parent=1 // pred_check
      _
    $region7: #{tpu_custom_call.1} parent=1 // pred_check_branch
      %23 = sbr.rel (0) target = $region9
    $region8: #{tpu_custom_call.1} parent=1 // pred_region
      %s25 = ssub.s32 2048, 2048
      %26 = vsyncadd [#allocation6], %s25
      %s27 = sshll.u32 [#allocation5], 4
      %s28 = int_to_ptr.vmem [resolvable:$true] %s27
      %33 = dma.hbm_to_vmem [thread:$0]  %s1, 2048, %s28, [#allocation6], 64, 64, 4
    $region9: #{tpu_custom_call.1} parent=1 // pred_fallthru
      _
    // Predicated region
    $region10: #{tpu_custom_call.1} parent=1 // pred_check
      _
    $region11: #{tpu_custom_call.1} parent=1 // pred_check_branch
      %35 = sbr.rel (0) target = $region13
    $region12: #{tpu_custom_call.1} parent=1 // pred_region
      %36 = dma.done [#allocation3], 2048
    $region13: #{tpu_custom_call.1} parent=1 // pred_fallthru
      _
    // Predicated region
    $region14: #{tpu_custom_call.1} parent=1 // pred_check
      _
    $region15: #{tpu_custom_call.1} parent=1 // pred_check_branch
      %38 = sbr.rel (0) target = $region17
    $region16: #{tpu_custom_call.1} parent=1 // pred_region
      %39 = dma.done [#allocation6], 2048
    $region17: #{tpu_custom_call.1} parent=1 // pred_fallthru
      _
    %v41 = vld [vmem:[#allocation2] sm:$0xff]
    %v42 = vld [vmem:[#allocation2 + $0x8] sm:$0xff]
    %v43 = vld [vmem:[#allocation2 + $0x10] sm:$0xff]
    %v44 = vld [vmem:[#allocation2 + $0x18] sm:$0xff]
    %v45 = vld [vmem:[#allocation2 + $0x20] sm:$0xff]
    %v46 = vld [vmem:[#allocation2 + $0x28] sm:$0xff]
    %v47 = vld [vmem:[#allocation2 + $0x30] sm:$0xff]
    %v48 = vld [vmem:[#allocation2 + $0x38] sm:$0xff]
    %v49 = vld [vmem:[#allocation2 + $0x40] sm:$0xff]
    %v50 = vld [vmem:[#allocation2 + $0x48] sm:$0xff]
    %v51 = vld [vmem:[#allocation2 + $0x50] sm:$0xff]
    %v52 = vld [vmem:[#allocation2 + $0x58] sm:$0xff]
    %v53 = vld [vmem:[#allocation2 + $0x60] sm:$0xff]
    %v54 = vld [vmem:[#allocation2 + $0x68] sm:$0xff]
    %v55 = vld [vmem:[#allocation2 + $0x70] sm:$0xff]
    %v56 = vld [vmem:[#allocation2 + $0x78] sm:$0xff]
    %v57 = vld [vmem:[#allocation5] sm:$0xf]
    %v58 = vld [vmem:[#allocation5 + $0x4] sm:$0xf]
    %v59 = vld [vmem:[#allocation5 + $0x8] sm:$0xf]
    %v60 = vld [vmem:[#allocation5 + $0xc] sm:$0xf]
    %v61 = vld [vmem:[#allocation5 + $0x10] sm:$0xf]
    %v62 = vld [vmem:[#allocation5 + $0x14] sm:$0xf]
    %v63 = vld [vmem:[#allocation5 + $0x18] sm:$0xf]
    %v64 = vld [vmem:[#allocation5 + $0x1c] sm:$0xf]
    %v65 = vld [vmem:[#allocation5 + $0x20] sm:$0xf]
    %v66 = vld [vmem:[#allocation5 + $0x24] sm:$0xf]
    %v67 = vld [vmem:[#allocation5 + $0x28] sm:$0xf]
    %v68 = vld [vmem:[#allocation5 + $0x2c] sm:$0xf]
    %v69 = vld [vmem:[#allocation5 + $0x30] sm:$0xf]
    %v70 = vld [vmem:[#allocation5 + $0x34] sm:$0xf]
    %v71 = vld [vmem:[#allocation5 + $0x38] sm:$0xf]
    %v72 = vld [vmem:[#allocation5 + $0x3c] sm:$0xf]
    %v73 = vld [vmem:[#allocation5 + $0x40] sm:$0xf]
    %v74 = vld [vmem:[#allocation5 + $0x44] sm:$0xf]
    %v75 = vld [vmem:[#allocation5 + $0x48] sm:$0xf]
    %v76 = vld [vmem:[#allocation5 + $0x4c] sm:$0xf]
    %v77 = vld [vmem:[#allocation5 + $0x50] sm:$0xf]
    %v78 = vld [vmem:[#allocation5 + $0x54] sm:$0xf]
    %v79 = vld [vmem:[#allocation5 + $0x58] sm:$0xf]
    %v80 = vld [vmem:[#allocation5 + $0x5c] sm:$0xf]
    %v81 = vld [vmem:[#allocation5 + $0x60] sm:$0xf]
    %v82 = vld [vmem:[#allocation5 + $0x64] sm:$0xf]
    %v83 = vld [vmem:[#allocation5 + $0x68] sm:$0xf]
    %v84 = vld [vmem:[#allocation5 + $0x6c] sm:$0xf]
    %v85 = vld [vmem:[#allocation5 + $0x70] sm:$0xf]
    %v86 = vld [vmem:[#allocation5 + $0x74] sm:$0xf]
    %v87 = vld [vmem:[#allocation5 + $0x78] sm:$0xf]
    %v88 = vld [vmem:[#allocation5 + $0x7c] sm:$0xf]
    %v105 = vunpack.c.l.b16 %v41
    %v106 = vunpack.c.h.b16 %v41
    %v107 = vunpack.c.l.b16 %v42
    %v108 = vunpack.c.h.b16 %v42
    %v109 = vunpack.c.l.b16 %v43
    %v110 = vunpack.c.h.b16 %v43
    %v111 = vunpack.c.l.b16 %v44
    %v112 = vunpack.c.h.b16 %v44
    %v113 = vunpack.c.l.b16 %v45
    %v114 = vunpack.c.h.b16 %v45
    %v115 = vunpack.c.l.b16 %v46
    %v116 = vunpack.c.h.b16 %v46
    %v117 = vunpack.c.l.b16 %v47
    %v118 = vunpack.c.h.b16 %v47
    %v119 = vunpack.c.l.b16 %v48
    %v120 = vunpack.c.h.b16 %v48
    %v121 = vunpack.c.l.b16 %v49
    %v122 = vunpack.c.h.b16 %v49
    %v123 = vunpack.c.l.b16 %v50
    %v124 = vunpack.c.h.b16 %v50
    %v125 = vunpack.c.l.b16 %v51
    %v126 = vunpack.c.h.b16 %v51
    %v127 = vunpack.c.l.b16 %v52
    %v128 = vunpack.c.h.b16 %v52
    %v129 = vunpack.c.l.b16 %v53
    %v130 = vunpack.c.h.b16 %v53
    %v131 = vunpack.c.l.b16 %v54
    %v132 = vunpack.c.h.b16 %v54
    %v133 = vunpack.c.l.b16 %v55
    %v134 = vunpack.c.h.b16 %v55
    %v135 = vunpack.c.l.b16 %v56
    %v136 = vunpack.c.h.b16 %v56
    %v137 = vpack.c.b16 %v107, %v105
    %v138 = vpack.c.b16 %v108, %v106
    %v139 = vpack.c.b16 %v111, %v109
    %v140 = vpack.c.b16 %v112, %v110
    %v141 = vpack.c.b16 %v115, %v113
    %v142 = vpack.c.b16 %v116, %v114
    %v143 = vpack.c.b16 %v119, %v117
    %v144 = vpack.c.b16 %v120, %v118
    %v145 = vpack.c.b16 %v123, %v121
    %v146 = vpack.c.b16 %v124, %v122
    %v147 = vpack.c.b16 %v127, %v125
    %v148 = vpack.c.b16 %v128, %v126
    %v149 = vpack.c.b16 %v131, %v129
    %v150 = vpack.c.b16 %v132, %v130
    %v151 = vpack.c.b16 %v135, %v133
    %v152 = vpack.c.b16 %v136, %v134
    %v201 = vunpack.c.l.b16 %v57
    %v202 = vunpack.c.l.b16 %v58
    %v203 = vunpack.c.l.b16 %v59
    %v204 = vunpack.c.l.b16 %v60
    %v205 = vunpack.c.l.b16 %v61
    %v206 = vunpack.c.l.b16 %v62
    %v207 = vunpack.c.l.b16 %v63
    %v208 = vunpack.c.l.b16 %v64
    %v209 = vunpack.c.l.b16 %v65
    %v210 = vunpack.c.l.b16 %v66
    %v211 = vunpack.c.l.b16 %v67
    %v212 = vunpack.c.l.b16 %v68
    %v213 = vunpack.c.l.b16 %v69
    %v214 = vunpack.c.l.b16 %v70
    %v215 = vunpack.c.l.b16 %v71
    %v216 = vunpack.c.l.b16 %v72
    %v217 = vunpack.c.l.b16 %v73
    %v218 = vunpack.c.l.b16 %v74
    %v219 = vunpack.c.l.b16 %v75
    %v220 = vunpack.c.l.b16 %v76
    %v221 = vunpack.c.l.b16 %v77
    %v222 = vunpack.c.l.b16 %v78
    %v223 = vunpack.c.l.b16 %v79
    %v224 = vunpack.c.l.b16 %v80
    %v225 = vunpack.c.l.b16 %v81
    %v226 = vunpack.c.l.b16 %v82
    %v227 = vunpack.c.l.b16 %v83
    %v228 = vunpack.c.l.b16 %v84
    %v229 = vunpack.c.l.b16 %v85
    %v230 = vunpack.c.l.b16 %v86
    %v231 = vunpack.c.l.b16 %v87
    %v232 = vunpack.c.l.b16 %v88
    %v233 = vpack.c.b16 %v202, %v201
    %v234 = vpack.c.b16 %v204, %v203
    %v235 = vpack.c.b16 %v206, %v205
    %v236 = vpack.c.b16 %v208, %v207
    %v237 = vpack.c.b16 %v210, %v209
    %v238 = vpack.c.b16 %v212, %v211
    %v239 = vpack.c.b16 %v214, %v213
    %v240 = vpack.c.b16 %v216, %v215
    %v241 = vpack.c.b16 %v218, %v217
    %v242 = vpack.c.b16 %v220, %v219
    %v243 = vpack.c.b16 %v222, %v221
    %v244 = vpack.c.b16 %v224, %v223
    %v245 = vpack.c.b16 %v226, %v225
    %v246 = vpack.c.b16 %v228, %v227
    %v247 = vpack.c.b16 %v230, %v229
    %v248 = vpack.c.b16 %v232, %v231
    %265 = vmatprep.subr.bf16.mxu0 0
    %266 = vmatpush1.bf16.msra.mxu0 %v233
    %267 = vmatprep.subr.bf16.mxu0 0
    %268 = vmatpush1.bf16.msra.mxu0 %v234
    %269 = vmatprep.subr.bf16.mxu0 0
    %270 = vmatpush1.bf16.msra.mxu0 %v235
    %271 = vmatprep.subr.bf16.mxu0 0
    %272 = vmatpush1.bf16.msra.mxu0 %v236
    %273 = vmatprep.subr.bf16.mxu0 0
    %274 = vmatpush1.bf16.msra.mxu0 %v237
    %275 = vmatprep.subr.bf16.mxu0 0
    %276 = vmatpush1.bf16.msra.mxu0 %v238
    %277 = vmatprep.subr.bf16.mxu0 0
    %278 = vmatpush1.bf16.msra.mxu0 %v239
    %279 = vmatprep.subr.bf16.mxu0 0
    %280 = vmatpush1.bf16.msra.mxu0 %v240
    %281 = vmatprep.subr.bf16.mxu0 0
    %282 = vmatpush1.bf16.msra.mxu0 %v241
    %283 = vmatprep.subr.bf16.mxu0 0
    %284 = vmatpush1.bf16.msra.mxu0 %v242
    %285 = vmatprep.subr.bf16.mxu0 0
    %286 = vmatpush1.bf16.msra.mxu0 %v243
    %287 = vmatprep.subr.bf16.mxu0 0
    %288 = vmatpush1.bf16.msra.mxu0 %v244
    %289 = vmatprep.subr.bf16.mxu0 0
    %290 = vmatpush1.bf16.msra.mxu0 %v245
    %291 = vmatprep.subr.bf16.mxu0 0
    %292 = vmatpush1.bf16.msra.mxu0 %v246
    %293 = vmatprep.subr.bf16.mxu0 0
    %294 = vmatpush1.bf16.msra.mxu0 %v247
    %295 = vmatprep.subr.bf16.mxu0 0
    %296 = vmatpush1.bf16.msra.mxu0 %v248
    %297 = vmatprep.mubr.bf16.mxu0 %v138
    %298 = vmatmul.mubr.bf16.gmra.mrb[0].mxu0 %v137
    %v299 = vpop.f32.mrb[0].mxu0
    %v300 = vadd.f32 0.0, %v299
    %v301 = vpop.f32.mrb[0].mxu0
    %v302 = vpop.f32.mrb[0].mxu0
    %v303 = vadd.f32 0.0, %v302
    %v304 = vpop.f32.mrb[0].mxu0
    %305 = vmatprep.mubr.bf16.mxu0 %v140
    %306 = vmatmul.mubr.bf16.gmra.mrb[0].mxu0 %v139
    %v307 = vpop.f32.mrb[0].mxu0
    %v308 = vadd.f32 0.0, %v307
    %v309 = vpop.f32.mrb[0].mxu0
    %v310 = vpop.f32.mrb[0].mxu0
    %v311 = vadd.f32 0.0, %v310
    %v312 = vpop.f32.mrb[0].mxu0
    %313 = vmatprep.mubr.bf16.mxu0 %v142
    %314 = vmatmul.mubr.bf16.gmra.mrb[0].mxu0 %v141
    %v315 = vpop.f32.mrb[0].mxu0
    %v316 = vadd.f32 0.0, %v315
    %v317 = vpop.f32.mrb[0].mxu0
    %v318 = vpop.f32.mrb[0].mxu0
    %v319 = vadd.f32 0.0, %v318
    %v320 = vpop.f32.mrb[0].mxu0
    %321 = vmatprep.mubr.bf16.mxu0 %v144
    %322 = vmatmul.mubr.bf16.gmra.mrb[0].mxu0 %v143
    %v323 = vpop.f32.mrb[0].mxu0
    %v324 = vadd.f32 0.0, %v323
    %v325 = vpop.f32.mrb[0].mxu0
    %v326 = vpop.f32.mrb[0].mxu0
    %v327 = vadd.f32 0.0, %v326
    %v328 = vpop.f32.mrb[0].mxu0
    %329 = vmatprep.mubr.bf16.mxu0 %v146
    %330 = vmatmul.mubr.bf16.gmra.mrb[0].mxu0 %v145
    %v331 = vpop.f32.mrb[0].mxu0
    %v332 = vadd.f32 0.0, %v331
    %v333 = vpop.f32.mrb[0].mxu0
    %v334 = vpop.f32.mrb[0].mxu0
    %v335 = vadd.f32 0.0, %v334
    %v336 = vpop.f32.mrb[0].mxu0
    %337 = vmatprep.mubr.bf16.mxu0 %v148
    %338 = vmatmul.mubr.bf16.gmra.mrb[0].mxu0 %v147
    %v339 = vpop.f32.mrb[0].mxu0
    %v340 = vadd.f32 0.0, %v339
    %v341 = vpop.f32.mrb[0].mxu0
    %v342 = vpop.f32.mrb[0].mxu0
    %v343 = vadd.f32 0.0, %v342
    %v344 = vpop.f32.mrb[0].mxu0
    %345 = vmatprep.mubr.bf16.mxu0 %v150
    %346 = vmatmul.mubr.bf16.gmra.mrb[0].mxu0 %v149
    %v347 = vpop.f32.mrb[0].mxu0
    %v348 = vadd.f32 0.0, %v347
    %v349 = vpop.f32.mrb[0].mxu0
    %v350 = vpop.f32.mrb[0].mxu0
    %v351 = vadd.f32 0.0, %v350
    %v352 = vpop.f32.mrb[0].mxu0
    %353 = vmatprep.mubr.bf16.mxu0 %v152
    %354 = vmatmul.mubr.bf16.gmra.mrb[0].mxu0 %v151
    %v355 = vpop.f32.mrb[0].mxu0
    %v356 = vadd.f32 0.0, %v355
    %v357 = vpop.f32.mrb[0].mxu0
    %v358 = vpop.f32.mrb[0].mxu0
    %v359 = vadd.f32 0.0, %v358
    %v360 = vpop.f32.mrb[0].mxu0
    %361 = vdwg.mxu0
    %362 = vst [vmem:[#allocation7] sm:$0xff] %v300
    %363 = vst [vmem:[#allocation7 + $0x8] sm:$0xff] %v303
    %364 = vst [vmem:[#allocation7 + $0x10] sm:$0xff] %v308
    %365 = vst [vmem:[#allocation7 + $0x18] sm:$0xff] %v311
    %366 = vst [vmem:[#allocation7 + $0x20] sm:$0xff] %v316
    %367 = vst [vmem:[#allocation7 + $0x28] sm:$0xff] %v319
    %368 = vst [vmem:[#allocation7 + $0x30] sm:$0xff] %v324
    %369 = vst [vmem:[#allocation7 + $0x38] sm:$0xff] %v327
    %370 = vst [vmem:[#allocation7 + $0x40] sm:$0xff] %v332
    %371 = vst [vmem:[#allocation7 + $0x48] sm:$0xff] %v335
    %372 = vst [vmem:[#allocation7 + $0x50] sm:$0xff] %v340
    %373 = vst [vmem:[#allocation7 + $0x58] sm:$0xff] %v343
    %374 = vst [vmem:[#allocation7 + $0x60] sm:$0xff] %v348
    %375 = vst [vmem:[#allocation7 + $0x68] sm:$0xff] %v351
    %376 = vst [vmem:[#allocation7 + $0x70] sm:$0xff] %v356
    %377 = vst [vmem:[#allocation7 + $0x78] sm:$0xff] %v359
    // Predicated region
    $region18: #{tpu_custom_call.1} parent=1 // pred_check
      _
    $region19: #{tpu_custom_call.1} parent=1 // pred_check_branch
      %379 = sbr.rel (0) target = $region21
    $region20: #{tpu_custom_call.1} parent=1 // pred_region
      %s381 = ssub.s32 2048, 2048
      %382 = vsyncadd [#allocation4], %s381
      %s383 = sshll.u32 [#allocation7], 4
      %s384 = int_to_ptr.vmem [resolvable:$true] %s383
      %389 = dma.vmem_to_hbm [thread:$0]  %s384, 2048, %s2, [#allocation4], 128, 128, 8
    $region21: #{tpu_custom_call.1} parent=1 // pred_fallthru
      _
    // Predicated region
    $region22: #{tpu_custom_call.1} parent=1 // pred_check
      _
    $region23: #{tpu_custom_call.1} parent=1 // pred_check_branch
      %391 = sbr.rel (0) target = $region25
    $region24: #{tpu_custom_call.1} parent=1 // pred_region
      %392 = dma.done [#allocation4], 2048
    $region25: #{tpu_custom_call.1} parent=1 // pred_fallthru
      _
    %393 = vsyncpa [#allocation3], 1
    %394 = vsyncpa [#allocation6], 1
    %395 = vsyncpa [#allocation4], 1

</llo_original>
